<compile_context>
chip_gen: v7x
topology: tpu7x:2x2x1
jax: 0.10.0
libtpu: 0.0.40
codegen_flags: <defaults>
</compile_context>

<pallas_src>
import jax
import jax.numpy as jnp
from jax.experimental import pallas as pl
from jax.experimental.pallas import tpu as pltpu

HIDDEN = 64  # fixed by LanderModel


def _lander_mlp_kernel(xt_ref, w1_ref, b1_ref, w2_ref, b2_ref, w3_ref, b3_ref,
                       ot_ref):
    # xt: [In, TB]; w1: [H, In]; w2: [H, H]; w3: [Out, H]; b*: [H,1]/[Out,1].
    # Whole per-tile chain stays in VMEM/vregs; batch lives on the lane axis.
    xt = xt_ref[...].astype(jnp.float32)
    h = jnp.dot(w1_ref[...], xt, preferred_element_type=jnp.float32)
    h = jnp.maximum(h + b1_ref[...], 0.0)                      # ReLU (VPU)
    h = jnp.dot(w2_ref[...], h, preferred_element_type=jnp.float32)
    h = jnp.maximum(h + b2_ref[...], 0.0)                      # ReLU (VPU)
    o = jnp.dot(w3_ref[...], h, preferred_element_type=jnp.float32)
    ot_ref[...] = (o + b3_ref[...]).astype(ot_ref.dtype)       # identity out


def _pick_batch_tile(B, block_b):
    """Lane-axis tile: a multiple of 128 (or the full batch) so loads/stores
    stay lane-dense; medium batches split into >=2 tiles for v7x's two TCs."""
    if B <= 128:
        return B                       # single full-extent block
    half = -(-B // 2)                  # ceil(B/2): at least 2 balanced tiles
    half_up = (-(-half // 128)) * 128  # round up to a lane multiple
    return max(128, min(block_b, half_up))


def lander_forward_t(xt, params, *, block_b=2048, stream_dtype=None):
    """Fused MLP on feature-major activations: xt [In, B] -> [Out, B]."""
    (w1, b1), (w2, b2), (w3, b3) = params
    In, B = xt.shape
    H = w1.shape[0]
    Out = w3.shape[0]

    block_b = max(128, (-(-block_b // 128)) * 128)
    tb = _pick_batch_tile(B, block_b)
    grid_b = pl.cdiv(B, tb)            # partial last block handled by Pallas

    if stream_dtype is not None:
        xt = xt.astype(stream_dtype)   # halve HBM traffic on x if requested

    flops = 2 * B * (In * H + H * H + H * Out)
    bytes_accessed = (
        jnp.dtype(xt.dtype).itemsize * B * In            # streamed input
        + 4 * B * Out                                    # streamed output
        + 4 * (In * H + H + H * H + H + H * Out + Out)   # resident params
    )
    cost = pl.CostEstimate(flops=flops, transcendentals=0,
                           bytes_accessed=bytes_accessed)

    return pl.pallas_call(
        _lander_mlp_kernel,
        out_shape=jax.ShapeDtypeStruct((Out, B), jnp.float32),
        grid=(grid_b,),
        in_specs=[
            # Activations: streamed / double-buffered over batch tiles.
            # (If a profile shows exposed DMA, add pipeline_mode=pl.Buffered(3).)
            pl.BlockSpec((In, tb), lambda i: (0, i)),
            # Weights/biases: full-extent blocks, VMEM-resident across the grid.
            pl.BlockSpec((H, In), lambda i: (0, 0)),
            pl.BlockSpec((H, 1), lambda i: (0, 0)),
            pl.BlockSpec((H, H), lambda i: (0, 0)),
            pl.BlockSpec((H, 1), lambda i: (0, 0)),
            pl.BlockSpec((Out, H), lambda i: (0, 0)),
            pl.BlockSpec((Out, 1), lambda i: (0, 0)),
        ],
        out_specs=pl.BlockSpec((Out, tb), lambda i: (0, i)),
        compiler_params=pltpu.CompilerParams(
            dimension_semantics=("parallel",),   # batch tiles across TCs (v7x)
        ),
        cost_estimate=cost,
    )(xt, w1, b1, w2, b2, w3, b3)


def lander_forward(x, params, *, block_b=2048, stream_dtype=None,
                   min_pallas_batch=16):
    """LanderModel.forward: relu(relu(x@W1^T+b1)@W2^T+b2)@W3^T+b3.

    x: [B, In].  params: ((W1,b1),(W2,b2),(W3,b3)) in PyTorch layout
    (W as [out, in], b pre-shaped [out, 1]).
    """
    (w1, b1), (w2, b2), (w3, b3) = params
    B = x.shape[0]

    if B < min_pallas_batch:
        # Launch-overhead-bound regime: a plain fused XLA MLP beats a
        # pallas_call for per-env-step RL inference.
        h = jnp.maximum(x @ w1.T + b1.T, 0.0)
        h = jnp.maximum(h @ w2.T + b2.T, 0.0)
        return h @ w3.T + b3.T

    # Batch-on-lanes kernel works on x^T; transpose only at the boundary.
    out_t = lander_forward_t(x.T, params, block_b=block_b,
                             stream_dtype=stream_dtype)
    return out_t.T


def init_lander_params(key, input_size, output_size):
    """Matches LanderModel.__init__: xavier_uniform_ weights, zero biases.

    Returns ((W1,b1),(W2,b2),(W3,b3)); W in PyTorch [out, in] layout, b as a
    column [out, 1] so the kernel broadcasts it along the lane (batch) axis.
    """
    sizes = [input_size, HIDDEN, HIDDEN, output_size]
    params = []
    for i in range(3):
        fan_in, fan_out = sizes[i], sizes[i + 1]
        key, sub = jax.random.split(key)
        a = jnp.sqrt(6.0 / (fan_in + fan_out))  # xavier_uniform bound
        w = jax.random.uniform(sub, (fan_out, fan_in), dtype=jnp.float32,
                               minval=-a, maxval=a)
        b = jnp.zeros((fan_out, 1), dtype=jnp.float32)
        params.append((w, b))
    return tuple(params)


def lander_forward_ref(x, params):
    (w1, b1), (w2, b2), (w3, b3) = params
    h = jnp.maximum(x @ w1.T + b1.T, 0.0)
    h = jnp.maximum(h @ w2.T + b2.T, 0.0)
    return h @ w3.T + b3.T


if __name__ == "__main__":
    key = jax.random.PRNGKey(0)

    # LunarLander-like dims: obs dim 8, 4 actions.
    input_size = 8
    output_size = 4

    k_x, k_p, k_x2 = jax.random.split(key, 3)
    params = init_lander_params(k_p, input_size, output_size)

    # Medium batch: exercises the Pallas path with 2 grid steps (v7x-friendly)
    # and a masked partial last block (200 = 128 + 72, no host pad/slice).
    batch = 200
    x = jax.random.normal(k_x, (batch, input_size), dtype=jnp.float32)
    out = jax.block_until_ready(lander_forward(x, params))
    ref = lander_forward_ref(x, params)
    assert out.shape == (batch, output_size)
    assert jnp.allclose(out, ref, atol=1e-5, rtol=1e-5)

    # Tiny RL-inference batch: takes the fused-XLA fast path.
    x_small = jax.random.normal(k_x2, (8, input_size), dtype=jnp.float32)
    out_small = jax.block_until_ready(lander_forward(x_small, params))
    assert out_small.shape == (8, output_size)
    assert jnp.allclose(out_small, lander_forward_ref(x_small, params),
                        atol=1e-5, rtol=1e-5)

    print("KERNEL_OK")
</pallas_src>

<mosaic_0001>
module attributes {stable_mosaic.version = 11 : i64} {
  func.func @_lander_mlp_kernel(%arg0: i32, %arg1: memref<8x128xf32, #tpu.memory_space<vmem>>, %arg2: memref<64x8xf32, #tpu.memory_space<vmem>>, %arg3: memref<64x1xf32, #tpu.memory_space<vmem>>, %arg4: memref<64x64xf32, #tpu.memory_space<vmem>>, %arg5: memref<64x1xf32, #tpu.memory_space<vmem>>, %arg6: memref<4x64xf32, #tpu.memory_space<vmem>>, %arg7: memref<4x1xf32, #tpu.memory_space<vmem>>, %arg8: memref<4x128xf32, #tpu.memory_space<vmem>>) attributes {dimension_semantics = [#tpu.dimension_semantics<parallel>], iteration_bounds = array<i64: 2>, scalar_prefetch = 0 : i64, scratch_operands = 0 : i64, tpu.core_type = #tpu.core_type<tc>, window_params = [{transform_indices = @transform_0, window_bounds = array<i64: 8, 128>}, {pipeline_mode = #tpu.pipeline_mode<synchronous>, transform_indices = @transform_1, window_bounds = array<i64: 64, 8>}, {pipeline_mode = #tpu.pipeline_mode<synchronous>, transform_indices = @transform_2, window_bounds = array<i64: 64, 1>}, {pipeline_mode = #tpu.pipeline_mode<synchronous>, transform_indices = @transform_3, window_bounds = array<i64: 64, 64>}, {pipeline_mode = #tpu.pipeline_mode<synchronous>, transform_indices = @transform_4, window_bounds = array<i64: 64, 1>}, {pipeline_mode = #tpu.pipeline_mode<synchronous>, transform_indices = @transform_5, window_bounds = array<i64: 4, 64>}, {pipeline_mode = #tpu.pipeline_mode<synchronous>, transform_indices = @transform_6, window_bounds = array<i64: 4, 1>}, {transform_indices = @transform_7, window_bounds = array<i64: 4, 128>}]} {
    %c0 = arith.constant 0 : index
    %c0_0 = arith.constant 0 : index
    %0 = vector.load %arg1[%c0, %c0_0] : memref<8x128xf32, #tpu.memory_space<vmem>>, vector<8x128xf32>
    %c0_1 = arith.constant 0 : index
    %c0_2 = arith.constant 0 : index
    %1 = vector.load %arg2[%c0_1, %c0_2] : memref<64x8xf32, #tpu.memory_space<vmem>>, vector<64x8xf32>
    %cst = arith.constant dense<0.000000e+00> : vector<64x128xf32>
    %2 = tpu.matmul %1, %0, %cst {dimension_numbers = #tpu.dot_dimension_numbers<[1], [0], [0], [1], [0, 0, 1, 1], [], []>} : vector<64x8xf32>, vector<8x128xf32>, vector<64x128xf32> -> vector<64x128xf32>
    %c0_3 = arith.constant 0 : index
    %c0_4 = arith.constant 0 : index
    %3 = vector.load %arg3[%c0_3, %c0_4] : memref<64x1xf32, #tpu.memory_space<vmem>>, vector<64x1xf32>
    %4 = vector.broadcast %3 : vector<64x1xf32> to vector<64x128xf32>
    %5 = arith.addf %2, %4 : vector<64x128xf32>
    %cst_5 = arith.constant 0.000000e+00 : f32
    %6 = vector.broadcast %cst_5 : f32 to vector<64x128xf32>
    %7 = arith.maximumf %5, %6 : vector<64x128xf32>
    %c0_6 = arith.constant 0 : index
    %c0_7 = arith.constant 0 : index
    %8 = vector.load %arg4[%c0_6, %c0_7] : memref<64x64xf32, #tpu.memory_space<vmem>>, vector<64x64xf32>
    %cst_8 = arith.constant dense<0.000000e+00> : vector<64x128xf32>
    %9 = tpu.matmul %8, %7, %cst_8 {dimension_numbers = #tpu.dot_dimension_numbers<[1], [0], [0], [1], [0, 0, 1, 1], [], []>} : vector<64x64xf32>, vector<64x128xf32>, vector<64x128xf32> -> vector<64x128xf32>
    %c0_9 = arith.constant 0 : index
    %c0_10 = arith.constant 0 : index
    %10 = vector.load %arg5[%c0_9, %c0_10] : memref<64x1xf32, #tpu.memory_space<vmem>>, vector<64x1xf32>
    %11 = vector.broadcast %10 : vector<64x1xf32> to vector<64x128xf32>
    %12 = arith.addf %9, %11 : vector<64x128xf32>
    %cst_11 = arith.constant 0.000000e+00 : f32
    %13 = vector.broadcast %cst_11 : f32 to vector<64x128xf32>
    %14 = arith.maximumf %12, %13 : vector<64x128xf32>
    %c0_12 = arith.constant 0 : index
    %c0_13 = arith.constant 0 : index
    %15 = vector.load %arg6[%c0_12, %c0_13] : memref<4x64xf32, #tpu.memory_space<vmem>>, vector<4x64xf32>
    %cst_14 = arith.constant dense<0.000000e+00> : vector<4x128xf32>
    %16 = tpu.matmul %15, %14, %cst_14 {dimension_numbers = #tpu.dot_dimension_numbers<[1], [0], [0], [1], [0, 0, 1, 1], [], []>} : vector<4x64xf32>, vector<64x128xf32>, vector<4x128xf32> -> vector<4x128xf32>
    %c0_15 = arith.constant 0 : index
    %c0_16 = arith.constant 0 : index
    %17 = vector.load %arg7[%c0_15, %c0_16] : memref<4x1xf32, #tpu.memory_space<vmem>>, vector<4x1xf32>
    %18 = vector.broadcast %17 : vector<4x1xf32> to vector<4x128xf32>
    %19 = arith.addf %16, %18 : vector<4x128xf32>
    %c0_17 = arith.constant 0 : index
    %c0_18 = arith.constant 0 : index
    %20 = vector.load %arg8[%c0_17, %c0_18] : memref<4x128xf32, #tpu.memory_space<vmem>>, vector<4x128xf32>
    tpu.vector_store %arg8[%c0_17, %c0_18], %19 {strides = array<i32>} : memref<4x128xf32, #tpu.memory_space<vmem>>, vector<4x128xf32>,
    return
  }
  func.func @transform_0(%arg0: i32) -> (i32, i32) {
    %c0_i32 = arith.constant 0 : i32
    %c0_i32_0 = arith.constant 0 : i32
    return %c0_i32, %arg0 : i32, i32
  }
  func.func @transform_1(%arg0: i32) -> (i32, i32) {
    %c0_i32 = arith.constant 0 : i32
    %c0_i32_0 = arith.constant 0 : i32
    %c0_i32_1 = arith.constant 0 : i32
    return %c0_i32, %c0_i32_0 : i32, i32
  }
  func.func @transform_2(%arg0: i32) -> (i32, i32) {
    %c0_i32 = arith.constant 0 : i32
    %c0_i32_0 = arith.constant 0 : i32
    %c0_i32_1 = arith.constant 0 : i32
    return %c0_i32, %c0_i32_0 : i32, i32
  }
  func.func @transform_3(%arg0: i32) -> (i32, i32) {
    %c0_i32 = arith.constant 0 : i32
    %c0_i32_0 = arith.constant 0 : i32
    %c0_i32_1 = arith.constant 0 : i32
    return %c0_i32, %c0_i32_0 : i32, i32
  }
  func.func @transform_4(%arg0: i32) -> (i32, i32) {
    %c0_i32 = arith.constant 0 : i32
    %c0_i32_0 = arith.constant 0 : i32
    %c0_i32_1 = arith.constant 0 : i32
    return %c0_i32, %c0_i32_0 : i32, i32
  }
  func.func @transform_5(%arg0: i32) -> (i32, i32) {
    %c0_i32 = arith.constant 0 : i32
    %c0_i32_0 = arith.constant 0 : i32
    %c0_i32_1 = arith.constant 0 : i32
    return %c0_i32, %c0_i32_0 : i32, i32
  }
  func.func @transform_6(%arg0: i32) -> (i32, i32) {
    %c0_i32 = arith.constant 0 : i32
    %c0_i32_0 = arith.constant 0 : i32
    %c0_i32_1 = arith.constant 0 : i32
    return %c0_i32, %c0_i32_0 : i32, i32
  }
  func.func @transform_7(%arg0: i32) -> (i32, i32) {
    %c0_i32 = arith.constant 0 : i32
    %c0_i32_0 = arith.constant 0 : i32
    return %c0_i32, %arg0 : i32, i32
  }
}

</mosaic_0001>

<llo_original>
// kernel: tpu_custom_call.1
$region0: #{tpu_custom_call.1}
  #allocation0 [shape = 'u32[]', space=smem, size = 0x4, offset = 0x4, fixed_abs, tag = 'smem constant byte address 0x4 - core index']
  #allocation1 [shape = 'u32[144,128]{1,0:T(1,128)}', space=vmem, size = 0x12000, scoped, tag = 'internal scratch']
  %s0 = inlined_call_operand.vmem [shape: f32[8,200], index: 0, kind: input, shape index: {}]
  %s1 = inlined_call_operand.vmem [shape: f32[64,8], index: 1, kind: input, shape index: {}]
  %s2 = inlined_call_operand.vmem [shape: f32[64,1], index: 2, kind: input, shape index: {}]
  %s3 = inlined_call_operand.vmem [shape: f32[64,64], index: 3, kind: input, shape index: {}]
  %s4 = inlined_call_operand.vmem [shape: f32[64,1], index: 4, kind: input, shape index: {}]
  %s5 = inlined_call_operand.vmem [shape: f32[4,64], index: 5, kind: input, shape index: {}]
  %s6 = inlined_call_operand.vmem [shape: f32[4,1], index: 6, kind: input, shape index: {}]
  %s7 = inlined_call_operand.hbm [shape: f32[4,200], index: 7, kind: output, shape index: {}]
  %s8 = sld [smem:[#allocation0]]
  $region61: #{tpu_custom_call.1} parent=0
    _
  %s10 = ssub.s32 1, %s8
  %s11 = scalar_select 0, %s10, %s8
  $region1: #{tpu_custom_call.1} parent=0
    #allocation2 [shape = 'u8[4096]{0}', space=vmem, size = 0x1000, scoped, tag = 'output window, operand 0']
    #allocation3 [shape = 's32[2]{0}', space=sflag, size = 0x8, scoped, tag = 'scoped memory for tpu_custom_call.1']
    %12 = vsyncpa [#allocation3], 0
    %s13 = scalar_lea.sflag [#allocation3], 1
    %14 = vsyncpa %s13, 0
    loop: start=0, step=1, limit=4
    $region2: #{tpu_custom_call.1} parent=1 // loop_pre_header
      _
    $region3: #{tpu_custom_call.1} parent=1 // loop_header
      %s16 = sphi 0, %s20
      %p17 = scmp.ge.s32.totalorder %s16, 4
      %s26 = sphi 0, %s28
      %s29 = sphi 0, %s26
      %s30 = sphi 0, %s29
      %s46 = sphi 0, %s30
      %s50 = sphi 0, %s50
      %s52 = sphi 0, %s50
      %s53 = sphi 0, %s52
      %s67 = sphi 0, %s53
      %s71 = sphi 0, %s71
      %s73 = sphi 0, %s71
      %s74 = sphi 0, %s73
      %s88 = sphi 0, %s74
      %s92 = sphi 0, %s92
      %s94 = sphi 0, %s92
      %s95 = sphi 0, %s94
      %s109 = sphi 0, %s95
      %s113 = sphi 0, %s113
      %s115 = sphi 0, %s113
      %s116 = sphi 0, %s115
      %s130 = sphi 0, %s116
      %s134 = sphi 0, %s134
      %s136 = sphi 0, %s134
      %s137 = sphi 0, %s136
      %s151 = sphi 0, %s137
      %s155 = sphi 0, %s155
      %s157 = sphi 0, %s155
      %s158 = sphi 0, %s157
      %s172 = sphi 0, %s158
      %s178 = sphi 0, %s180
      %s181 = sphi 0, %s178
      %s182 = sphi 0, %s181
      %s198 = sphi 0, %s182
    $region4: #{tpu_custom_call.1} parent=1 // loop_header_branch
      %19 = sbr.rel (%p17) target = $region8
    $region5: #{tpu_custom_call.1} parent=1 // loop_body
      %s21 = ssub.s32 %s16, 1
      %s22 = ssub.s32 %s16, 2
      %s23 = sadd.s32 %s16, 1
      %s24 = ssub.s32 %s16, %s23
      %p25 = scmp.eq.s32.totalorder %s24, 0
      %s27 = sadd.s32 %s26, 1
      %s28 = scalar_select %p25, %s26, %s27
      %p31 = pneg %p25
      %p32 = scmp.eq.s32.totalorder %s16, 1
      %p33 = por %p31, %p32
      %p34 = scmp.ne.s32.totalorder %s26, %s29
      %p35 = scmp.eq.s32.totalorder %s16, 0
      %p36 = por %p34, %p35
      %p37 = scmp.ne.s32.totalorder %s26, %s29
      %p38 = scmp.eq.s32.totalorder %s21, 1
      %p39 = por %p37, %p38
      %p40 = scmp.ne.s32.totalorder %s29, %s30
      %p41 = scmp.eq.s32.totalorder %s21, 0
      %p42 = por %p40, %p41
      %p43 = scmp.ne.s32.totalorder %s29, %s30
      %p44 = scmp.eq.s32.totalorder %s22, 1
      %p45 = por %p43, %p44
      %p47 = scmp.ne.s32.totalorder %s30, %s46
      %p48 = scmp.eq.s32.totalorder %s22, 0
      %p49 = por %p47, %p48
      %s51 = sadd.s32 %s50, 1
      %p54 = scmp.eq.s32.totalorder %s16, 1
      %p55 = scmp.ne.s32.totalorder %s50, %s52
      %p56 = scmp.eq.s32.totalorder %s16, 0
      %p57 = por %p55, %p56
      %p58 = scmp.ne.s32.totalorder %s50, %s52
      %p59 = scmp.eq.s32.totalorder %s21, 1
      %p60 = por %p58, %p59
      %p61 = scmp.ne.s32.totalorder %s52, %s53
      %p62 = scmp.eq.s32.totalorder %s21, 0
      %p63 = por %p61, %p62
      %p64 = scmp.ne.s32.totalorder %s52, %s53
      %p65 = scmp.eq.s32.totalorder %s22, 1
      %p66 = por %p64, %p65
      %p68 = scmp.ne.s32.totalorder %s53, %s67
      %p69 = scmp.eq.s32.totalorder %s22, 0
      %p70 = por %p68, %p69
      %s72 = sadd.s32 %s71, 1
      %p75 = scmp.eq.s32.totalorder %s16, 1
      %p76 = scmp.ne.s32.totalorder %s71, %s73
      %p77 = scmp.eq.s32.totalorder %s16, 0
      %p78 = por %p76, %p77
      %p79 = scmp.ne.s32.totalorder %s71, %s73
      %p80 = scmp.eq.s32.totalorder %s21, 1
      %p81 = por %p79, %p80
      %p82 = scmp.ne.s32.totalorder %s73, %s74
      %p83 = scmp.eq.s32.totalorder %s21, 0
      %p84 = por %p82, %p83
      %p85 = scmp.ne.s32.totalorder %s73, %s74
      %p86 = scmp.eq.s32.totalorder %s22, 1
      %p87 = por %p85, %p86
      %p89 = scmp.ne.s32.totalorder %s74, %s88
      %p90 = scmp.eq.s32.totalorder %s22, 0
      %p91 = por %p89, %p90
      %s93 = sadd.s32 %s92, 1
      %p96 = scmp.eq.s32.totalorder %s16, 1
      %p97 = scmp.ne.s32.totalorder %s92, %s94
      %p98 = scmp.eq.s32.totalorder %s16, 0
      %p99 = por %p97, %p98
      %p100 = scmp.ne.s32.totalorder %s92, %s94
      %p101 = scmp.eq.s32.totalorder %s21, 1
      %p102 = por %p100, %p101
      %p103 = scmp.ne.s32.totalorder %s94, %s95
      %p104 = scmp.eq.s32.totalorder %s21, 0
      %p105 = por %p103, %p104
      %p106 = scmp.ne.s32.totalorder %s94, %s95
      %p107 = scmp.eq.s32.totalorder %s22, 1
      %p108 = por %p106, %p107
      %p110 = scmp.ne.s32.totalorder %s95, %s109
      %p111 = scmp.eq.s32.totalorder %s22, 0
      %p112 = por %p110, %p111
      %s114 = sadd.s32 %s113, 1
      %p117 = scmp.eq.s32.totalorder %s16, 1
      %p118 = scmp.ne.s32.totalorder %s113, %s115
      %p119 = scmp.eq.s32.totalorder %s16, 0
      %p120 = por %p118, %p119
      %p121 = scmp.ne.s32.totalorder %s113, %s115
      %p122 = scmp.eq.s32.totalorder %s21, 1
      %p123 = por %p121, %p122
      %p124 = scmp.ne.s32.totalorder %s115, %s116
      %p125 = scmp.eq.s32.totalorder %s21, 0
      %p126 = por %p124, %p125
      %p127 = scmp.ne.s32.totalorder %s115, %s116
      %p128 = scmp.eq.s32.totalorder %s22, 1
      %p129 = por %p127, %p128
      %p131 = scmp.ne.s32.totalorder %s116, %s130
      %p132 = scmp.eq.s32.totalorder %s22, 0
      %p133 = por %p131, %p132
      %s135 = sadd.s32 %s134, 1
      %p138 = scmp.eq.s32.totalorder %s16, 1
      %p139 = scmp.ne.s32.totalorder %s134, %s136
      %p140 = scmp.eq.s32.totalorder %s16, 0
      %p141 = por %p139, %p140
      %p142 = scmp.ne.s32.totalorder %s134, %s136
      %p143 = scmp.eq.s32.totalorder %s21, 1
      %p144 = por %p142, %p143
      %p145 = scmp.ne.s32.totalorder %s136, %s137
      %p146 = scmp.eq.s32.totalorder %s21, 0
      %p147 = por %p145, %p146
      %p148 = scmp.ne.s32.totalorder %s136, %s137
      %p149 = scmp.eq.s32.totalorder %s22, 1
      %p150 = por %p148, %p149
      %p152 = scmp.ne.s32.totalorder %s137, %s151
      %p153 = scmp.eq.s32.totalorder %s22, 0
      %p154 = por %p152, %p153
      %s156 = sadd.s32 %s155, 1
      %p159 = scmp.eq.s32.totalorder %s16, 1
      %p160 = scmp.ne.s32.totalorder %s155, %s157
      %p161 = scmp.eq.s32.totalorder %s16, 0
      %p162 = por %p160, %p161
      %p163 = scmp.ne.s32.totalorder %s155, %s157
      %p164 = scmp.eq.s32.totalorder %s21, 1
      %p165 = por %p163, %p164
      %p166 = scmp.ne.s32.totalorder %s157, %s158
      %p167 = scmp.eq.s32.totalorder %s21, 0
      %p168 = por %p166, %p167
      %p169 = scmp.ne.s32.totalorder %s157, %s158
      %p170 = scmp.eq.s32.totalorder %s22, 1
      %p171 = por %p169, %p170
      %p173 = scmp.ne.s32.totalorder %s158, %s172
      %p174 = scmp.eq.s32.totalorder %s22, 0
      %p175 = por %p173, %p174
      %s176 = ssub.s32 %s16, %s23
      %p177 = scmp.eq.s32.totalorder %s176, 0
      %s179 = sadd.s32 %s178, 1
      %s180 = scalar_select %p177, %s178, %s179
      %p183 = pneg %p177
      %p184 = scmp.eq.s32.totalorder %s16, 1
      %p185 = por %p183, %p184
      %p186 = scmp.ne.s32.totalorder %s178, %s181
      %p187 = scmp.eq.s32.totalorder %s16, 0
      %p188 = por %p186, %p187
      %p189 = scmp.ne.s32.totalorder %s178, %s181
      %p190 = scmp.eq.s32.totalorder %s21, 1
      %p191 = por %p189, %p190
      %p192 = scmp.ne.s32.totalorder %s181, %s182
      %p193 = scmp.eq.s32.totalorder %s21, 0
      %p194 = por %p192, %p193
      %p195 = scmp.ne.s32.totalorder %s181, %s182
      %p196 = scmp.eq.s32.totalorder %s22, 1
      %p197 = por %p195, %p196
      %p199 = scmp.ne.s32.totalorder %s182, %s198
      %p200 = scmp.eq.s32.totalorder %s22, 0
      %p201 = por %p199, %p200
      %p202 = scmp.le.s32.totalorder 1, %s16
      %p203 = scmp.lt.s32.totalorder %s16, 3
      %p204 = pnand %p202, %p203
      %p205 = pneg %p204
      // Predicated region
      $region9: #{tpu_custom_call.1} parent=5 // pred_check
        _
      $region10: #{tpu_custom_call.1} parent=5 // pred_check_branch
        %207 = sbr.rel (%p204) target = $region12
      $region11: #{tpu_custom_call.1} parent=5 // pred_region
        %s208 = ssub.s32 %s16, 1
        // Predicated region
        $region13: #{tpu_custom_call.1} parent=11 // pred_check
          %p209 = pneg %p63
        $region14: #{tpu_custom_call.1} parent=11 // pred_check_branch
          %211 = sbr.rel (%p209) target = $region16
        $region15: #{tpu_custom_call.1} parent=11 // pred_region
          _
        $region16: #{tpu_custom_call.1} parent=11 // pred_fallthru
          _
        // Predicated region
        $region17: #{tpu_custom_call.1} parent=11 // pred_check
          %p212 = pneg %p84
        $region18: #{tpu_custom_call.1} parent=11 // pred_check_branch
          %214 = sbr.rel (%p212) target = $region20
        $region19: #{tpu_custom_call.1} parent=11 // pred_region
          _
        $region20: #{tpu_custom_call.1} parent=11 // pred_fallthru
          _
        // Predicated region
        $region21: #{tpu_custom_call.1} parent=11 // pred_check
          %p215 = pneg %p105
        $region22: #{tpu_custom_call.1} parent=11 // pred_check_branch
          %217 = sbr.rel (%p215) target = $region24
        $region23: #{tpu_custom_call.1} parent=11 // pred_region
          _
        $region24: #{tpu_custom_call.1} parent=11 // pred_fallthru
          _
        // Predicated region
        $region25: #{tpu_custom_call.1} parent=11 // pred_check
          %p218 = pneg %p126
        $region26: #{tpu_custom_call.1} parent=11 // pred_check_branch
          %220 = sbr.rel (%p218) target = $region28
        $region27: #{tpu_custom_call.1} parent=11 // pred_region
          _
        $region28: #{tpu_custom_call.1} parent=11 // pred_fallthru
          _
        // Predicated region
        $region29: #{tpu_custom_call.1} parent=11 // pred_check
          %p221 = pneg %p147
        $region30: #{tpu_custom_call.1} parent=11 // pred_check_branch
          %223 = sbr.rel (%p221) target = $region32
        $region31: #{tpu_custom_call.1} parent=11 // pred_region
          _
        $region32: #{tpu_custom_call.1} parent=11 // pred_fallthru
          _
        // Predicated region
        $region33: #{tpu_custom_call.1} parent=11 // pred_check
          %p224 = pneg %p168
        $region34: #{tpu_custom_call.1} parent=11 // pred_check_branch
          %226 = sbr.rel (%p224) target = $region36
        $region35: #{tpu_custom_call.1} parent=11 // pred_region
          _
        $region36: #{tpu_custom_call.1} parent=11 // pred_fallthru
          _
      $region12: #{tpu_custom_call.1} parent=5 // pred_fallthru
        _
      %p227 = scmp.lt.s32.totalorder %s16, 2
      // Predicated region
      $region37: #{tpu_custom_call.1} parent=5 // pred_check
        %p228 = pneg %p227
      $region38: #{tpu_custom_call.1} parent=5 // pred_check_branch
        %230 = sbr.rel (%p228) target = $region40
      $region39: #{tpu_custom_call.1} parent=5 // pred_region
        // Predicated region
        $region41: #{tpu_custom_call.1} parent=39 // pred_check
          %p231 = pneg %p36
        $region42: #{tpu_custom_call.1} parent=39 // pred_check_branch
          %233 = sbr.rel (%p231) target = $region44
        $region43: #{tpu_custom_call.1} parent=39 // pred_region
          %p234 = scmp.lt.s32.totalorder %s16, 1
          %s235 = scalar_select %p234, %s16, 1
          %s236 = smul.addr %s235, 8
          %s237 = scalar_lea.vmem %s0, %s236
        $region44: #{tpu_custom_call.1} parent=39 // pred_fallthru
          _
      $region40: #{tpu_custom_call.1} parent=5 // pred_fallthru
        _
      %p238 = scmp.le.s32.totalorder 1, %s16
      %p239 = scmp.lt.s32.totalorder %s16, 3
      %p240 = pnand %p238, %p239
      %p241 = pneg %p240
      // Predicated region
      $region45: #{tpu_custom_call.1} parent=5 // pred_check
        _
      $region46: #{tpu_custom_call.1} parent=5 // pred_check_branch
        %243 = sbr.rel (%p240) target = $region48
      $region47: #{tpu_custom_call.1} parent=5 // pred_region
        %s244 = ssub.s32 %s16, 1
        %p245 = scmp.lt.s32.totalorder %s21, 1
        %s246 = scalar_select %p245, %s21, 1
        %s247 = smul.addr %s246, 8
        %s248 = scalar_lea.vmem %s0, %s247
        %p249 = pneg %p42
        %p250 = pneg %p39
        %p251 = pneg %p63
        %p252 = pneg %p60
        %p253 = pneg %p84
        %p254 = pneg %p81
        %p255 = pneg %p105
        %p256 = pneg %p102
        %p257 = pneg %p126
        %p258 = pneg %p123
        %p259 = pneg %p147
        %p260 = pneg %p144
        %p261 = pneg %p168
        %p262 = pneg %p165
        %p263 = pneg %p194
        %p264 = pneg %p191
        %s265 = sand.u32 %s181, 1
        %s266 = scalar_lea.sflag [#allocation3], %s265
        %s267 = sand.u32 %s181, 1
        %s268 = smul.addr %s267, 4
        %s269 = scalar_lea.vmem [#allocation2], %s268
        %p270 = scmp.lt.s32.totalorder %s21, 1
        %s271 = scalar_select %p270, %s21, 1
        %s272 = smul.addr %s271, 8
        %s273 = scalar_lea.vmem %s0, %s272
        %v274 = vld [vmem:[%s273] sm:$0xff]
        %v275 = vld [vmem:[%s1] sm:$0xff]
        %v276 = vld [vmem:[%s1 + $0x8] sm:$0xff]
        %v277 = vld [vmem:[%s1 + $0x10] sm:$0xff]
        %v278 = vld [vmem:[%s1 + $0x18] sm:$0xff]
        %v279 = vld [vmem:[%s1 + $0x20] sm:$0xff]
        %v280 = vld [vmem:[%s1 + $0x28] sm:$0xff]
        %v281 = vld [vmem:[%s1 + $0x30] sm:$0xff]
        %v282 = vld [vmem:[%s1 + $0x38] sm:$0xff]
        %v283 = vld [vmem:[%s2] sm:$0xff]
        %v284 = vld [vmem:[%s2 + $0x8] sm:$0xff]
        %v285 = vld [vmem:[%s2 + $0x10] sm:$0xff]
        %v286 = vld [vmem:[%s2 + $0x18] sm:$0xff]
        %v287 = vld [vmem:[%s2 + $0x20] sm:$0xff]
        %v288 = vld [vmem:[%s2 + $0x28] sm:$0xff]
        %v289 = vld [vmem:[%s2 + $0x30] sm:$0xff]
        %v290 = vld [vmem:[%s2 + $0x38] sm:$0xff]
        %292 = vset.pattern.permute.xlu0 0
        %293 = vperm.xlu0 %292, %v283
        %v294 = vpop.permute.xlu0 %293
        %297 = vset.pattern.permute.xlu0 0
        %298 = vperm.xlu0 %297, %v284
        %v299 = vpop.permute.xlu0 %298
        %302 = vset.pattern.permute.xlu0 0
        %303 = vperm.xlu0 %302, %v285
        %v304 = vpop.permute.xlu0 %303
        %307 = vset.pattern.permute.xlu0 0
        %308 = vperm.xlu0 %307, %v286
        %v309 = vpop.permute.xlu0 %308
        %312 = vset.pattern.permute.xlu0 0
        %313 = vperm.xlu0 %312, %v287
        %v314 = vpop.permute.xlu0 %313
        %317 = vset.pattern.permute.xlu0 0
        %318 = vperm.xlu0 %317, %v288
        %v319 = vpop.permute.xlu0 %318
        %322 = vset.pattern.permute.xlu0 0
        %323 = vperm.xlu0 %322, %v289
        %v324 = vpop.permute.xlu0 %323
        %327 = vset.pattern.permute.xlu0 0
        %328 = vperm.xlu0 %327, %v290
        %v329 = vpop.permute.xlu0 %328
        %vm331 = vcmask 64512
        %v333 = vsel %vm331, %v275, 0
        %v336 = vsel %vm331, %v276, 0
        %v339 = vsel %vm331, %v277, 0
        %v342 = vsel %vm331, %v278, 0
        %v345 = vsel %vm331, %v279, 0
        %v348 = vsel %vm331, %v280, 0
        %v351 = vsel %vm331, %v281, 0
        %v354 = vsel %vm331, %v282, 0
        %356 = vmatprep.subr.mxu0 0.0
        %357 = vmatpush1.msra.mxu0 %v274
        %358 = vmatprep.subr.mxu0 0.0
        %359 = vmatpush1.msra.mxu0 0.0
        %360 = vmatprep.subr.mxu0 0.0
        %361 = vmatpush1.msra.mxu0 0.0
        %362 = vmatprep.subr.mxu0 0.0
        %363 = vmatpush1.msra.mxu0 0.0
        %364 = vmatprep.subr.mxu0 0.0
        %365 = vmatpush1.msra.mxu0 0.0
        %366 = vmatprep.subr.mxu0 0.0
        %367 = vmatpush1.msra.mxu0 0.0
        %368 = vmatprep.subr.mxu0 0.0
        %369 = vmatpush1.msra.mxu0 0.0
        %370 = vmatprep.subr.mxu0 0.0
        %371 = vmatpush1.msra.mxu0 0.0
        %372 = vmatprep.subr.mxu0 0.0
        %373 = vmatpush1.msra.mxu0 0.0
        %374 = vmatprep.subr.mxu0 0.0
        %375 = vmatpush1.msra.mxu0 0.0
        %376 = vmatprep.subr.mxu0 0.0
        %377 = vmatpush1.msra.mxu0 0.0
        %378 = vmatprep.subr.mxu0 0.0
        %379 = vmatpush1.msra.mxu0 0.0
        %380 = vmatprep.subr.mxu0 0.0
        %381 = vmatpush1.msra.mxu0 0.0
        %382 = vmatprep.subr.mxu0 0.0
        %383 = vmatpush1.msra.mxu0 0.0
        %384 = vmatprep.subr.mxu0 0.0
        %385 = vmatpush1.msra.mxu0 0.0
        %386 = vmatprep.subr.mxu0 0.0
        %387 = vmatpush1.msra.mxu0 0.0
        %388 = vmatprep.subr.mxu0 0.0
        %389 = vmatpush1.msra.mxu0 0.0
        %390 = vmatprep.subr.mxu0 0.0
        %391 = vmatpush1.msra.mxu0 0.0
        %392 = vmatprep.subr.mxu0 0.0
        %393 = vmatpush1.msra.mxu0 0.0
        %394 = vmatprep.subr.mxu0 0.0
        %395 = vmatpush1.msra.mxu0 0.0
        %396 = vmatprep.subr.mxu0 0.0
        %397 = vmatpush1.msra.mxu0 0.0
        %398 = vmatprep.subr.mxu0 0.0
        %399 = vmatpush1.msra.mxu0 0.0
        %400 = vmatprep.subr.mxu0 0.0
        %401 = vmatpush1.msra.mxu0 0.0
        %402 = vmatprep.subr.mxu0 0.0
        %403 = vmatpush1.msra.mxu0 0.0
        %404 = vmatprep.subr.mxu0 0.0
        %405 = vmatpush1.msra.mxu0 0.0
        %406 = vmatprep.subr.mxu0 0.0
        %407 = vmatpush1.msra.mxu0 0.0
        %408 = vmatprep.subr.mxu0 0.0
        %409 = vmatpush1.msra.mxu0 0.0
        %410 = vmatprep.subr.mxu0 0.0
        %411 = vmatpush1.msra.mxu0 0.0
        %412 = vmatprep.subr.mxu0 0.0
        %413 = vmatpush1.msra.mxu0 0.0
        %414 = vmatprep.subr.mxu0 0.0
        %415 = vmatpush1.msra.mxu0 0.0
        %416 = vmatprep.subr.mxu0 0.0
        %417 = vmatpush1.msra.mxu0 0.0
        %418 = vmatprep.subr.mxu0 0.0
        %419 = vmatpush1.msra.mxu0 0.0
        %420 = vmatprep.mubr.f32.mxu0 0.0
        %421 = vmatmul.mubr.f32.gmra.mrb[0].mxu0 %v333
        %v422 = vpop.f32.mrb[0].mxu0
        %v423 = vadd.f32 %v294, %v422
        %v424 = vpop.f32.mrb[0].mxu0
        %425 = vmatprep.mubr.f32.mxu0 0.0
        %426 = vmatmul.mubr.f32.gmra.mrb[0].mxu0 %v336
        %v427 = vpop.f32.mrb[0].mxu0
        %v428 = vadd.f32 %v299, %v427
        %v429 = vpop.f32.mrb[0].mxu0
        %430 = vmatprep.mubr.f32.mxu0 0.0
        %431 = vmatmul.mubr.f32.gmra.mrb[0].mxu0 %v339
        %v432 = vpop.f32.mrb[0].mxu0
        %v433 = vadd.f32 %v304, %v432
        %v434 = vpop.f32.mrb[0].mxu0
        %435 = vmatprep.mubr.f32.mxu0 0.0
        %436 = vmatmul.mubr.f32.gmra.mrb[0].mxu0 %v342
        %v437 = vpop.f32.mrb[0].mxu0
        %v438 = vadd.f32 %v309, %v437
        %v439 = vpop.f32.mrb[0].mxu0
        %440 = vmatprep.mubr.f32.mxu0 0.0
        %441 = vmatmul.mubr.f32.gmra.mrb[0].mxu0 %v345
        %v442 = vpop.f32.mrb[0].mxu0
        %v443 = vadd.f32 %v314, %v442
        %v444 = vpop.f32.mrb[0].mxu0
        %445 = vmatprep.mubr.f32.mxu0 0.0
        %446 = vmatmul.mubr.f32.gmra.mrb[0].mxu0 %v348
        %v447 = vpop.f32.mrb[0].mxu0
        %v448 = vadd.f32 %v319, %v447
        %v449 = vpop.f32.mrb[0].mxu0
        %450 = vmatprep.mubr.f32.mxu0 0.0
        %451 = vmatmul.mubr.f32.gmra.mrb[0].mxu0 %v351
        %v452 = vpop.f32.mrb[0].mxu0
        %v453 = vadd.f32 %v324, %v452
        %v454 = vpop.f32.mrb[0].mxu0
        %455 = vmatprep.mubr.f32.mxu0 0.0
        %456 = vmatmul.mubr.f32.gmra.mrb[0].mxu0 %v354
        %v457 = vpop.f32.mrb[0].mxu0
        %v458 = vadd.f32 %v329, %v457
        %v459 = vpop.f32.mrb[0].mxu0
        %460 = vdwg.mxu0
        %v461 = vmax.f32 %v423, 0.0
        %v462 = vmax.f32 %v428, 0.0
        %v463 = vmax.f32 %v433, 0.0
        %v464 = vmax.f32 %v438, 0.0
        %v465 = vmax.f32 %v443, 0.0
        %v466 = vmax.f32 %v448, 0.0
        %v467 = vmax.f32 %v453, 0.0
        %v468 = vmax.f32 %v458, 0.0
        %v469 = vld [vmem:[%s3] sm:$0xff]
        %v470 = vld [vmem:[%s3 + $0x8] sm:$0xff]
        %v471 = vld [vmem:[%s3 + $0x10] sm:$0xff]
        %v472 = vld [vmem:[%s3 + $0x18] sm:$0xff]
        %v473 = vld [vmem:[%s3 + $0x20] sm:$0xff]
        %v474 = vld [vmem:[%s3 + $0x28] sm:$0xff]
        %v475 = vld [vmem:[%s3 + $0x30] sm:$0xff]
        %v476 = vld [vmem:[%s3 + $0x38] sm:$0xff]
        %v477 = vld [vmem:[%s4] sm:$0xff]
        %v478 = vld [vmem:[%s4 + $0x8] sm:$0xff]
        %v479 = vld [vmem:[%s4 + $0x10] sm:$0xff]
        %v480 = vld [vmem:[%s4 + $0x18] sm:$0xff]
        %v481 = vld [vmem:[%s4 + $0x20] sm:$0xff]
        %v482 = vld [vmem:[%s4 + $0x28] sm:$0xff]
        %v483 = vld [vmem:[%s4 + $0x30] sm:$0xff]
        %v484 = vld [vmem:[%s4 + $0x38] sm:$0xff]
        %486 = vset.pattern.permute.xlu0 0
        %487 = vperm.xlu0 %486, %v477
        %v488 = vpop.permute.xlu0 %487
        %491 = vset.pattern.permute.xlu0 0
        %492 = vperm.xlu0 %491, %v478
        %v493 = vpop.permute.xlu0 %492
        %496 = vset.pattern.permute.xlu0 0
        %497 = vperm.xlu0 %496, %v479
        %v498 = vpop.permute.xlu0 %497
        %501 = vset.pattern.permute.xlu0 0
        %502 = vperm.xlu0 %501, %v480
        %v503 = vpop.permute.xlu0 %502
        %506 = vset.pattern.permute.xlu0 0
        %507 = vperm.xlu0 %506, %v481
        %v508 = vpop.permute.xlu0 %507
        %511 = vset.pattern.permute.xlu0 0
        %512 = vperm.xlu0 %511, %v482
        %v513 = vpop.permute.xlu0 %512
        %516 = vset.pattern.permute.xlu0 0
        %517 = vperm.xlu0 %516, %v483
        %v518 = vpop.permute.xlu0 %517
        %521 = vset.pattern.permute.xlu0 0
        %522 = vperm.xlu0 %521, %v484
        %v523 = vpop.permute.xlu0 %522
        %vm525 = vcmask 523264
        %v527 = vsel %vm525, %v469, 0
        %v530 = vsel %vm525, %v470, 0
        %v533 = vsel %vm525, %v471, 0
        %v536 = vsel %vm525, %v472, 0
        %v539 = vsel %vm525, %v473, 0
        %v542 = vsel %vm525, %v474, 0
        %v545 = vsel %vm525, %v475, 0
        %v548 = vsel %vm525, %v476, 0
        %550 = vmatprep.subr.mxu0 0.0
        %551 = vmatpush1.msra.mxu0 %v461
        %552 = vmatprep.subr.mxu0 0.0
        %553 = vmatpush1.msra.mxu0 %v462
        %554 = vmatprep.subr.mxu0 0.0
        %555 = vmatpush1.msra.mxu0 %v463
        %556 = vmatprep.subr.mxu0 0.0
        %557 = vmatpush1.msra.mxu0 %v464
        %558 = vmatprep.subr.mxu0 0.0
        %559 = vmatpush1.msra.mxu0 %v465
        %560 = vmatprep.subr.mxu0 0.0
        %561 = vmatpush1.msra.mxu0 %v466
        %562 = vmatprep.subr.mxu0 0.0
        %563 = vmatpush1.msra.mxu0 %v467
        %564 = vmatprep.subr.mxu0 0.0
        %565 = vmatpush1.msra.mxu0 %v468
        %566 = vmatprep.subr.mxu0 0.0
        %567 = vmatpush1.msra.mxu0 0.0
        %568 = vmatprep.subr.mxu0 0.0
        %569 = vmatpush1.msra.mxu0 0.0
        %570 = vmatprep.subr.mxu0 0.0
        %571 = vmatpush1.msra.mxu0 0.0
        %572 = vmatprep.subr.mxu0 0.0
        %573 = vmatpush1.msra.mxu0 0.0
        %574 = vmatprep.subr.mxu0 0.0
        %575 = vmatpush1.msra.mxu0 0.0
        %576 = vmatprep.subr.mxu0 0.0
        %577 = vmatpush1.msra.mxu0 0.0
        %578 = vmatprep.subr.mxu0 0.0
        %579 = vmatpush1.msra.mxu0 0.0
        %580 = vmatprep.subr.mxu0 0.0
        %581 = vmatpush1.msra.mxu0 0.0
        %582 = vmatprep.subr.mxu0 0.0
        %583 = vmatpush1.msra.mxu0 0.0
        %584 = vmatprep.subr.mxu0 0.0
        %585 = vmatpush1.msra.mxu0 0.0
        %586 = vmatprep.subr.mxu0 0.0
        %587 = vmatpush1.msra.mxu0 0.0
        %588 = vmatprep.subr.mxu0 0.0
        %589 = vmatpush1.msra.mxu0 0.0
        %590 = vmatprep.subr.mxu0 0.0
        %591 = vmatpush1.msra.mxu0 0.0
        %592 = vmatprep.subr.mxu0 0.0
        %593 = vmatpush1.msra.mxu0 0.0
        %594 = vmatprep.subr.mxu0 0.0
        %595 = vmatpush1.msra.mxu0 0.0
        %596 = vmatprep.subr.mxu0 0.0
        %597 = vmatpush1.msra.mxu0 0.0
        %598 = vmatprep.subr.mxu0 0.0
        %599 = vmatpush1.msra.mxu0 0.0
        %600 = vmatprep.subr.mxu0 0.0
        %601 = vmatpush1.msra.mxu0 0.0
        %602 = vmatprep.subr.mxu0 0.0
        %603 = vmatpush1.msra.mxu0 0.0
        %604 = vmatprep.subr.mxu0 0.0
        %605 = vmatpush1.msra.mxu0 0.0
        %606 = vmatprep.subr.mxu0 0.0
        %607 = vmatpush1.msra.mxu0 0.0
        %608 = vmatprep.subr.mxu0 0.0
        %609 = vmatpush1.msra.mxu0 0.0
        %610 = vmatprep.subr.mxu0 0.0
        %611 = vmatpush1.msra.mxu0 0.0
        %612 = vmatprep.subr.mxu0 0.0
        %613 = vmatpush1.msra.mxu0 0.0
        %614 = vmatprep.mubr.f32.mxu0 0.0
        %615 = vmatmul.mubr.f32.gmra.mrb[0].mxu0 %v527
        %v616 = vpop.f32.mrb[0].mxu0
        %v617 = vadd.f32 %v488, %v616
        %v618 = vpop.f32.mrb[0].mxu0
        %619 = vmatprep.mubr.f32.mxu0 0.0
        %620 = vmatmul.mubr.f32.gmra.mrb[0].mxu0 %v530
        %v621 = vpop.f32.mrb[0].mxu0
        %v622 = vadd.f32 %v493, %v621
        %v623 = vpop.f32.mrb[0].mxu0
        %624 = vmatprep.mubr.f32.mxu0 0.0
        %625 = vmatmul.mubr.f32.gmra.mrb[0].mxu0 %v533
        %v626 = vpop.f32.mrb[0].mxu0
        %v627 = vadd.f32 %v498, %v626
        %v628 = vpop.f32.mrb[0].mxu0
        %629 = vmatprep.mubr.f32.mxu0 0.0
        %630 = vmatmul.mubr.f32.gmra.mrb[0].mxu0 %v536
        %v631 = vpop.f32.mrb[0].mxu0
        %v632 = vadd.f32 %v503, %v631
        %v633 = vpop.f32.mrb[0].mxu0
        %634 = vmatprep.mubr.f32.mxu0 0.0
        %635 = vmatmul.mubr.f32.gmra.mrb[0].mxu0 %v539
        %v636 = vpop.f32.mrb[0].mxu0
        %v637 = vadd.f32 %v508, %v636
        %v638 = vpop.f32.mrb[0].mxu0
        %639 = vmatprep.mubr.f32.mxu0 0.0
        %640 = vmatmul.mubr.f32.gmra.mrb[0].mxu0 %v542
        %v641 = vpop.f32.mrb[0].mxu0
        %v642 = vadd.f32 %v513, %v641
        %v643 = vpop.f32.mrb[0].mxu0
        %644 = vmatprep.mubr.f32.mxu0 0.0
        %645 = vmatmul.mubr.f32.gmra.mrb[0].mxu0 %v545
        %v646 = vpop.f32.mrb[0].mxu0
        %v647 = vadd.f32 %v518, %v646
        %v648 = vpop.f32.mrb[0].mxu0
        %649 = vmatprep.mubr.f32.mxu0 0.0
        %650 = vmatmul.mubr.f32.gmra.mrb[0].mxu0 %v548
        %v651 = vpop.f32.mrb[0].mxu0
        %v652 = vadd.f32 %v523, %v651
        %v653 = vpop.f32.mrb[0].mxu0
        %654 = vdwg.mxu0
        %v655 = vmax.f32 %v617, 0.0
        %v656 = vmax.f32 %v622, 0.0
        %v657 = vmax.f32 %v627, 0.0
        %v658 = vmax.f32 %v632, 0.0
        %v659 = vmax.f32 %v637, 0.0
        %v660 = vmax.f32 %v642, 0.0
        %v661 = vmax.f32 %v647, 0.0
        %v662 = vmax.f32 %v652, 0.0
        %v663 = vld [vmem:[%s5] sm:$0xf]
        %v664 = vld [vmem:[%s6] sm:$0xf]
        %666 = vset.pattern.permute.xlu0 0
        %667 = vperm.xlu0 %666, %v664
        %v668 = vpop.permute.xlu0 %667
        %v671 = vsel %vm525, %v663, 0
        %673 = vmatprep.subr.mxu0 0.0
        %674 = vmatpush1.msra.mxu0 %v655
        %675 = vmatprep.subr.mxu0 0.0
        %676 = vmatpush1.msra.mxu0 %v656
        %677 = vmatprep.subr.mxu0 0.0
        %678 = vmatpush1.msra.mxu0 %v657
        %679 = vmatprep.subr.mxu0 0.0
        %680 = vmatpush1.msra.mxu0 %v658
        %681 = vmatprep.subr.mxu0 0.0
        %682 = vmatpush1.msra.mxu0 %v659
        %683 = vmatprep.subr.mxu0 0.0
        %684 = vmatpush1.msra.mxu0 %v660
        %685 = vmatprep.subr.mxu0 0.0
        %686 = vmatpush1.msra.mxu0 %v661
        %687 = vmatprep.subr.mxu0 0.0
        %688 = vmatpush1.msra.mxu0 %v662
        %689 = vmatprep.subr.mxu0 0.0
        %690 = vmatpush1.msra.mxu0 0.0
        %691 = vmatprep.subr.mxu0 0.0
        %692 = vmatpush1.msra.mxu0 0.0
        %693 = vmatprep.subr.mxu0 0.0
        %694 = vmatpush1.msra.mxu0 0.0
        %695 = vmatprep.subr.mxu0 0.0
        %696 = vmatpush1.msra.mxu0 0.0
        %697 = vmatprep.subr.mxu0 0.0
        %698 = vmatpush1.msra.mxu0 0.0
        %699 = vmatprep.subr.mxu0 0.0
        %700 = vmatpush1.msra.mxu0 0.0
        %701 = vmatprep.subr.mxu0 0.0
        %702 = vmatpush1.msra.mxu0 0.0
        %703 = vmatprep.subr.mxu0 0.0
        %704 = vmatpush1.msra.mxu0 0.0
        %705 = vmatprep.subr.mxu0 0.0
        %706 = vmatpush1.msra.mxu0 0.0
        %707 = vmatprep.subr.mxu0 0.0
        %708 = vmatpush1.msra.mxu0 0.0
        %709 = vmatprep.subr.mxu0 0.0
        %710 = vmatpush1.msra.mxu0 0.0
        %711 = vmatprep.subr.mxu0 0.0
        %712 = vmatpush1.msra.mxu0 0.0
        %713 = vmatprep.subr.mxu0 0.0
        %714 = vmatpush1.msra.mxu0 0.0
        %715 = vmatprep.subr.mxu0 0.0
        %716 = vmatpush1.msra.mxu0 0.0
        %717 = vmatprep.subr.mxu0 0.0
        %718 = vmatpush1.msra.mxu0 0.0
        %719 = vmatprep.subr.mxu0 0.0
        %720 = vmatpush1.msra.mxu0 0.0
        %721 = vmatprep.subr.mxu0 0.0
        %722 = vmatpush1.msra.mxu0 0.0
        %723 = vmatprep.subr.mxu0 0.0
        %724 = vmatpush1.msra.mxu0 0.0
        %725 = vmatprep.subr.mxu0 0.0
        %726 = vmatpush1.msra.mxu0 0.0
        %727 = vmatprep.subr.mxu0 0.0
        %728 = vmatpush1.msra.mxu0 0.0
        %729 = vmatprep.subr.mxu0 0.0
        %730 = vmatpush1.msra.mxu0 0.0
        %731 = vmatprep.subr.mxu0 0.0
        %732 = vmatpush1.msra.mxu0 0.0
        %733 = vmatprep.subr.mxu0 0.0
        %734 = vmatpush1.msra.mxu0 0.0
        %735 = vmatprep.subr.mxu0 0.0
        %736 = vmatpush1.msra.mxu0 0.0
        %737 = vmatprep.mubr.f32.mxu0 0.0
        %738 = vmatmul.mubr.f32.gmra.mrb[0].mxu0 %v671
        %v739 = vpop.f32.mrb[0].mxu0
        %v740 = vadd.f32 %v668, %v739
        %v741 = vpop.f32.mrb[0].mxu0
        %742 = vdwg.mxu0
        %743 = vst [vmem:[%s269] sm:$0xf] %v740
        %s744 = sand.u32 %s181, 1
        %s745 = scalar_lea.sflag [#allocation3], %s744
        %s746 = sand.u32 %s181, 1
        %s747 = smul.addr %s746, 4
        %s748 = scalar_lea.vmem [#allocation2], %s747
        // Predicated region
        $region49: #{tpu_custom_call.1} parent=47 // pred_check
          %p749 = pneg %p191
        $region50: #{tpu_custom_call.1} parent=47 // pred_check_branch
          %751 = sbr.rel (%p749) target = $region52
        $region51: #{tpu_custom_call.1} parent=47 // pred_region
          %s753 = ssub.s32 64, 64
          %754 = vsyncadd %s745, %s753
          %s755 = smul.addr %s21, 64
          %s756 = scalar_lea.hbm %s7, %s755
          %s758 = sshll.u32 %s748, 4
          %s759 = int_to_ptr.vmem [resolvable:$true] %s758
          %761 = dma.vmem_to_hbm [thread:$0]  %s759, 64, %s756, %s745
        $region52: #{tpu_custom_call.1} parent=47 // pred_fallthru
          _
      $region48: #{tpu_custom_call.1} parent=5 // pred_fallthru
        _
      %p762 = scmp.le.s32.totalorder 2, %s16
      // Predicated region
      $region53: #{tpu_custom_call.1} parent=5 // pred_check
        %p763 = pneg %p762
      $region54: #{tpu_custom_call.1} parent=5 // pred_check_branch
        %765 = sbr.rel (%p763) target = $region56
      $region55: #{tpu_custom_call.1} parent=5 // pred_region
        %s766 = ssub.s32 %s16, 2
        // Predicated region
        $region57: #{tpu_custom_call.1} parent=55 // pred_check
          %p767 = pneg %p197
        $region58: #{tpu_custom_call.1} parent=55 // pred_check_branch
          %769 = sbr.rel (%p767) target = $region60
        $region59: #{tpu_custom_call.1} parent=55 // pred_region
          %s770 = sand.u32 %s182, 1
          %s771 = scalar_lea.sflag [#allocation3], %s770
          %s772 = sand.u32 %s182, 1
          %s773 = smul.addr %s772, 4
          %s774 = scalar_lea.vmem [#allocation2], %s773
          %775 = dma.done %s771, 64
        $region60: #{tpu_custom_call.1} parent=55 // pred_fallthru
          _
      $region56: #{tpu_custom_call.1} parent=5 // pred_fallthru
        _
    $region6: #{tpu_custom_call.1} parent=1 // loop_footer
      %s20 = sadd.s32 1, %s16
    $region7: #{tpu_custom_call.1} parent=1 // loop_footer_branch
      %15 = sbr.rel target = $region3
    $region8: #{tpu_custom_call.1} parent=1 // loop_exit
      _
    %776 = vsyncpa [#allocation3], 1
    %s777 = scalar_lea.sflag [#allocation3], 1
    %778 = vsyncpa %s777, 1

</llo_original>
